<compile_context>
chip_gen: v7x
topology: tpu7x:2x2x1
jax: 0.10.0
libtpu: 0.0.40
codegen_flags: <defaults>
</compile_context>

<pallas_src>
import functools

import jax
import jax.numpy as jnp
from jax.experimental import pallas as pl
from jax.experimental.pallas import tpu as pltpu


_K = 784      # in_features (= 1*28*28), full last dim -> lane rule satisfied
_N = 10       # out_features
_NP = 128     # N padded to one full 128-lane tile (lane-dense stores)
_MAX_TB = 1024  # rows per batch tile; f32 tile ~3.1 MiB, safe on v5e/v6e/v7x


def _round_up(x, m):
    return ((x + m - 1) // m) * m


def _cdiv(a, b):
    return (a + b - 1) // b


def _linear_kernel(x_ref, w_ref, b_ref, o_ref):
    # x_ref: (TB, 784) f32   w_ref: (784, 128) f32
    # b_ref: (1, 128)  f32   o_ref: (TB, 128)  f32
    acc = jnp.dot(x_ref[...], w_ref[...], preferred_element_type=jnp.float32)
    o_ref[...] = acc + b_ref[...]


@jax.jit
def net_forward(x, weight, bias):
    """x: (B, 1, 28, 28) f32; weight: (10, 784) f32; bias: (10,) f32 -> (B, 10) f32."""
    B = x.shape[0]

    # Flatten exactly like torch's x.view(x.size(0), -1): contiguous reshape,
    # free bitcast, no dtype change / no K padding.
    x_flat = x.reshape(B, -1)

    # Adaptive batch tiling:
    #   - TB is a multiple of 8 (sublane rule) and <= _MAX_TB,
    #   - >= 2 grid steps when B permits (v7x 2-TC sharding + pipeline overlap),
    #   - B_pad overshoots B by at most one tile-rounding (few % for large B).
    B8 = _round_up(B, 8)
    min_steps = 2 if B8 >= 16 else 1
    nsteps = max(min_steps, _cdiv(B8, _MAX_TB))
    TB = _round_up(_cdiv(B8, nsteps), 8)
    B_pad = nsteps * TB
    if B_pad != B:
        x_flat = jnp.pad(x_flat, ((0, B_pad - B), (0, 0)))

    # Prepare params once inside jit (folded by XLA): transpose + zero-pad N.
    w_t = jnp.zeros((_K, _NP), jnp.float32)
    w_t = w_t.at[:, :_N].set(weight.T.astype(jnp.float32))
    b2 = jnp.zeros((1, _NP), jnp.float32)
    b2 = b2.at[:, :_N].set(bias.astype(jnp.float32))

    grid = (nsteps,)

    out_padded = pl.pallas_call(
        _linear_kernel,
        out_shape=jax.ShapeDtypeStruct((B_pad, _NP), jnp.float32),
        grid_spec=pltpu.PrefetchScalarGridSpec(
            num_scalar_prefetch=0,
            grid=grid,
            in_specs=[
                # Activation: tiled over batch -> double-buffered DMA pipeline,
                # read once from HBM in f32.
                pl.BlockSpec((TB, _K), lambda i: (i, 0)),
                # Weight & bias: constant block index -> VMEM-resident.
                pl.BlockSpec((_K, _NP), lambda i: (0, 0)),
                pl.BlockSpec((1, _NP), lambda i: (0, 0)),
            ],
            out_specs=pl.BlockSpec((TB, _NP), lambda i: (i, 0)),
        ),
        compiler_params=pltpu.CompilerParams(
            dimension_semantics=("parallel",),  # shards batch tiles across v7x TCs
        ),
        cost_estimate=pl.CostEstimate(
            flops=2 * B_pad * _K * _NP,
            transcendentals=0,
            bytes_accessed=(B_pad * _K * 4        # f32 activations read
                            + _K * _NP * 4        # f32 weight read
                            + B_pad * _NP * 4),   # f32 output write
        ),
    )(x_flat, w_t, b2)

    # Drop batch padding and the lane padding on N.
    return out_padded[:B, :_N]


if __name__ == "__main__":
    key = jax.random.PRNGKey(0)
    kx, kw, kb = jax.random.split(key, 3)

    B = 2
    # MNIST-like input implied by Linear(784, 10): (B, 1, 28, 28)
    x = jax.random.normal(kx, (B, 1, 28, 28), dtype=jnp.float32)

    # Deterministic params matching nn.Linear conventions: weight (10, 784), bias (10,)
    bound = 1.0 / jnp.sqrt(784.0)
    weight = jax.random.uniform(kw, (10, 784), jnp.float32, -bound, bound)
    bias = jax.random.uniform(kb, (10,), jnp.float32, -bound, bound)

    out = net_forward(x, weight, bias)
    jax.block_until_ready(out)

    # Sanity check against plain-JAX f32 reference (all-f32 path -> tight tol).
    ref = x.reshape(B, -1) @ weight.T + bias
    assert out.shape == (B, 10)
    assert jnp.allclose(out, ref, atol=1e-4, rtol=1e-4), (
        f"max abs err {jnp.max(jnp.abs(out - ref))}")

    print("KERNEL_OK")
</pallas_src>

<mosaic_0001>
module attributes {stable_mosaic.version = 11 : i64} {
  func.func @_linear_kernel(%arg0: i32, %arg1: memref<8x784xf32, #tpu.memory_space<vmem>>, %arg2: memref<784x128xf32, #tpu.memory_space<vmem>>, %arg3: memref<1x128xf32, #tpu.memory_space<vmem>>, %arg4: memref<8x128xf32, #tpu.memory_space<vmem>>) attributes {dimension_semantics = [#tpu.dimension_semantics<parallel>], iteration_bounds = array<i64: 1>, scalar_prefetch = 0 : i64, scratch_operands = 0 : i64, tpu.core_type = #tpu.core_type<tc>, window_params = [{transform_indices = @transform_0, window_bounds = array<i64: 8, 784>}, {pipeline_mode = #tpu.pipeline_mode<synchronous>, transform_indices = @transform_1, window_bounds = array<i64: 784, 128>}, {pipeline_mode = #tpu.pipeline_mode<synchronous>, transform_indices = @transform_2, window_bounds = array<i64: 1, 128>}, {transform_indices = @transform_3, window_bounds = array<i64: 8, 128>}]} {
    %c0 = arith.constant 0 : index
    %c0_0 = arith.constant 0 : index
    %0 = vector.load %arg1[%c0, %c0_0] : memref<8x784xf32, #tpu.memory_space<vmem>>, vector<8x784xf32>
    %c0_1 = arith.constant 0 : index
    %c0_2 = arith.constant 0 : index
    %1 = vector.load %arg2[%c0_1, %c0_2] : memref<784x128xf32, #tpu.memory_space<vmem>>, vector<784x128xf32>
    %cst = arith.constant dense<0.000000e+00> : vector<8x128xf32>
    %2 = tpu.matmul %0, %1, %cst {dimension_numbers = #tpu.dot_dimension_numbers<[1], [0], [0], [1], [0, 0, 1, 1], [], []>} : vector<8x784xf32>, vector<784x128xf32>, vector<8x128xf32> -> vector<8x128xf32>
    %c0_3 = arith.constant 0 : index
    %c0_4 = arith.constant 0 : index
    %3 = vector.load %arg3[%c0_3, %c0_4] : memref<1x128xf32, #tpu.memory_space<vmem>>, vector<1x128xf32>
    %4 = vector.broadcast %3 : vector<1x128xf32> to vector<8x128xf32>
    %5 = arith.addf %2, %4 : vector<8x128xf32>
    %c0_5 = arith.constant 0 : index
    %c0_6 = arith.constant 0 : index
    %6 = vector.load %arg4[%c0_5, %c0_6] : memref<8x128xf32, #tpu.memory_space<vmem>>, vector<8x128xf32>
    tpu.vector_store %arg4[%c0_5, %c0_6], %5 {strides = array<i32>} : memref<8x128xf32, #tpu.memory_space<vmem>>, vector<8x128xf32>,
    return
  }
  func.func @transform_0(%arg0: i32) -> (i32, i32) {
    %c0_i32 = arith.constant 0 : i32
    %c0_i32_0 = arith.constant 0 : i32
    return %arg0, %c0_i32 : i32, i32
  }
  func.func @transform_1(%arg0: i32) -> (i32, i32) {
    %c0_i32 = arith.constant 0 : i32
    %c0_i32_0 = arith.constant 0 : i32
    %c0_i32_1 = arith.constant 0 : i32
    return %c0_i32, %c0_i32_0 : i32, i32
  }
  func.func @transform_2(%arg0: i32) -> (i32, i32) {
    %c0_i32 = arith.constant 0 : i32
    %c0_i32_0 = arith.constant 0 : i32
    %c0_i32_1 = arith.constant 0 : i32
    return %c0_i32, %c0_i32_0 : i32, i32
  }
  func.func @transform_3(%arg0: i32) -> (i32, i32) {
    %c0_i32 = arith.constant 0 : i32
    %c0_i32_0 = arith.constant 0 : i32
    return %arg0, %c0_i32 : i32, i32
  }
}

</mosaic_0001>

<llo_original>
// kernel: net_forward.1
$region0: #{net_forward.1}
  #allocation0 [shape = 'u32[]', space=smem, size = 0x4, offset = 0x4, fixed_abs, tag = 'smem constant byte address 0x4 - core index']
  #allocation1 [shape = 'u32[144,128]{1,0:T(1,128)}', space=vmem, size = 0x12000, scoped, tag = 'internal scratch']
  %s0 = inlined_call_operand.vmem [shape: f32[8,784], index: 0, kind: input, shape index: {}]
  %s1 = inlined_call_operand.vmem [shape: f32[784,128], index: 1, kind: input, shape index: {}]
  %s2 = inlined_call_operand.vmem [shape: f32[1,128], index: 2, kind: input, shape index: {}]
  %s3 = inlined_call_operand.vmem [shape: f32[8,128], index: 3, kind: output, shape index: {}]
  %s4 = sld [smem:[#allocation0]]
  $region22: #{net_forward.1} parent=0
    _
  %s6 = ssub.s32 1, %s4
  %s7 = scalar_select 0, %s6, %s4
  // Predicated region
  $region2: #{net_forward.1} parent=0 // pred_check
    _
  $region3: #{net_forward.1} parent=0 // pred_check_branch
    %9 = sbr.rel (0) target = $region5
  $region4: #{net_forward.1} parent=0 // pred_region
    _
  $region5: #{net_forward.1} parent=0 // pred_fallthru
    _
  // Predicated region
  $region6: #{net_forward.1} parent=0 // pred_check
    _
  $region7: #{net_forward.1} parent=0 // pred_check_branch
    %11 = sbr.rel (0) target = $region9
  $region8: #{net_forward.1} parent=0 // pred_region
    _
  $region9: #{net_forward.1} parent=0 // pred_fallthru
    _
  // Predicated region
  $region10: #{net_forward.1} parent=0 // pred_check
    _
  $region11: #{net_forward.1} parent=0 // pred_check_branch
    %13 = sbr.rel (0) target = $region13
  $region12: #{net_forward.1} parent=0 // pred_region
    _
  $region13: #{net_forward.1} parent=0 // pred_fallthru
    _
  %v14 = vld [vmem:[%s0] sm:$0xff]
  %v15 = vld [vmem:[%s0 + $0x8] sm:$0xff]
  %v16 = vld [vmem:[%s0 + $0x10] sm:$0xff]
  %v17 = vld [vmem:[%s0 + $0x18] sm:$0xff]
  %v18 = vld [vmem:[%s0 + $0x20] sm:$0xff]
  %v19 = vld [vmem:[%s0 + $0x28] sm:$0xff]
  %v20 = vld [vmem:[%s0 + $0x30] sm:$0xff]
  %v21 = vld [vmem:[%s1] sm:$0xff]
  %v22 = vld [vmem:[%s1 + $0x8] sm:$0xff]
  %v23 = vld [vmem:[%s1 + $0x10] sm:$0xff]
  %v24 = vld [vmem:[%s1 + $0x18] sm:$0xff]
  %v25 = vld [vmem:[%s1 + $0x20] sm:$0xff]
  %v26 = vld [vmem:[%s1 + $0x28] sm:$0xff]
  %v27 = vld [vmem:[%s1 + $0x30] sm:$0xff]
  %v28 = vld [vmem:[%s1 + $0x38] sm:$0xff]
  %v29 = vld [vmem:[%s1 + $0x40] sm:$0xff]
  %v30 = vld [vmem:[%s1 + $0x48] sm:$0xff]
  %v31 = vld [vmem:[%s1 + $0x50] sm:$0xff]
  %v32 = vld [vmem:[%s1 + $0x58] sm:$0xff]
  %v33 = vld [vmem:[%s1 + $0x60] sm:$0xff]
  %v34 = vld [vmem:[%s1 + $0x68] sm:$0xff]
  %v35 = vld [vmem:[%s1 + $0x70] sm:$0xff]
  %v36 = vld [vmem:[%s1 + $0x78] sm:$0xff]
  %v37 = vld [vmem:[%s1 + $0x80] sm:$0xff]
  %v38 = vld [vmem:[%s1 + $0x88] sm:$0xff]
  %v39 = vld [vmem:[%s1 + $0x90] sm:$0xff]
  %v40 = vld [vmem:[%s1 + $0x98] sm:$0xff]
  %v41 = vld [vmem:[%s1 + $0xa0] sm:$0xff]
  %v42 = vld [vmem:[%s1 + $0xa8] sm:$0xff]
  %v43 = vld [vmem:[%s1 + $0xb0] sm:$0xff]
  %v44 = vld [vmem:[%s1 + $0xb8] sm:$0xff]
  %v45 = vld [vmem:[%s1 + $0xc0] sm:$0xff]
  %v46 = vld [vmem:[%s1 + $0xc8] sm:$0xff]
  %v47 = vld [vmem:[%s1 + $0xd0] sm:$0xff]
  %v48 = vld [vmem:[%s1 + $0xd8] sm:$0xff]
  %v49 = vld [vmem:[%s1 + $0xe0] sm:$0xff]
  %v50 = vld [vmem:[%s1 + $0xe8] sm:$0xff]
  %v51 = vld [vmem:[%s1 + $0xf0] sm:$0xff]
  %v52 = vld [vmem:[%s1 + $0xf8] sm:$0xff]
  %v53 = vld [vmem:[%s1 + $0x100] sm:$0xff]
  %v54 = vld [vmem:[%s1 + $0x108] sm:$0xff]
  %v55 = vld [vmem:[%s1 + $0x110] sm:$0xff]
  %v56 = vld [vmem:[%s1 + $0x118] sm:$0xff]
  %v57 = vld [vmem:[%s1 + $0x120] sm:$0xff]
  %v58 = vld [vmem:[%s1 + $0x128] sm:$0xff]
  %v59 = vld [vmem:[%s1 + $0x130] sm:$0xff]
  %v60 = vld [vmem:[%s1 + $0x138] sm:$0xff]
  %v61 = vld [vmem:[%s1 + $0x140] sm:$0xff]
  %v62 = vld [vmem:[%s1 + $0x148] sm:$0xff]
  %v63 = vld [vmem:[%s1 + $0x150] sm:$0xff]
  %v64 = vld [vmem:[%s1 + $0x158] sm:$0xff]
  %v65 = vld [vmem:[%s1 + $0x160] sm:$0xff]
  %v66 = vld [vmem:[%s1 + $0x168] sm:$0xff]
  %v67 = vld [vmem:[%s1 + $0x170] sm:$0xff]
  %v68 = vld [vmem:[%s1 + $0x178] sm:$0xff]
  %v69 = vld [vmem:[%s1 + $0x180] sm:$0xff]
  %v70 = vld [vmem:[%s1 + $0x188] sm:$0xff]
  %v71 = vld [vmem:[%s1 + $0x190] sm:$0xff]
  %v72 = vld [vmem:[%s1 + $0x198] sm:$0xff]
  %v73 = vld [vmem:[%s1 + $0x1a0] sm:$0xff]
  %v74 = vld [vmem:[%s1 + $0x1a8] sm:$0xff]
  %v75 = vld [vmem:[%s1 + $0x1b0] sm:$0xff]
  %v76 = vld [vmem:[%s1 + $0x1b8] sm:$0xff]
  %v77 = vld [vmem:[%s1 + $0x1c0] sm:$0xff]
  %v78 = vld [vmem:[%s1 + $0x1c8] sm:$0xff]
  %v79 = vld [vmem:[%s1 + $0x1d0] sm:$0xff]
  %v80 = vld [vmem:[%s1 + $0x1d8] sm:$0xff]
  %v81 = vld [vmem:[%s1 + $0x1e0] sm:$0xff]
  %v82 = vld [vmem:[%s1 + $0x1e8] sm:$0xff]
  %v83 = vld [vmem:[%s1 + $0x1f0] sm:$0xff]
  %v84 = vld [vmem:[%s1 + $0x1f8] sm:$0xff]
  %v85 = vld [vmem:[%s1 + $0x200] sm:$0xff]
  %v86 = vld [vmem:[%s1 + $0x208] sm:$0xff]
  %v87 = vld [vmem:[%s1 + $0x210] sm:$0xff]
  %v88 = vld [vmem:[%s1 + $0x218] sm:$0xff]
  %v89 = vld [vmem:[%s1 + $0x220] sm:$0xff]
  %v90 = vld [vmem:[%s1 + $0x228] sm:$0xff]
  %v91 = vld [vmem:[%s1 + $0x230] sm:$0xff]
  %v92 = vld [vmem:[%s1 + $0x238] sm:$0xff]
  %v93 = vld [vmem:[%s1 + $0x240] sm:$0xff]
  %v94 = vld [vmem:[%s1 + $0x248] sm:$0xff]
  %v95 = vld [vmem:[%s1 + $0x250] sm:$0xff]
  %v96 = vld [vmem:[%s1 + $0x258] sm:$0xff]
  %v97 = vld [vmem:[%s1 + $0x260] sm:$0xff]
  %v98 = vld [vmem:[%s1 + $0x268] sm:$0xff]
  %v99 = vld [vmem:[%s1 + $0x270] sm:$0xff]
  %v100 = vld [vmem:[%s1 + $0x278] sm:$0xff]
  %v101 = vld [vmem:[%s1 + $0x280] sm:$0xff]
  %v102 = vld [vmem:[%s1 + $0x288] sm:$0xff]
  %v103 = vld [vmem:[%s1 + $0x290] sm:$0xff]
  %v104 = vld [vmem:[%s1 + $0x298] sm:$0xff]
  %v105 = vld [vmem:[%s1 + $0x2a0] sm:$0xff]
  %v106 = vld [vmem:[%s1 + $0x2a8] sm:$0xff]
  %v107 = vld [vmem:[%s1 + $0x2b0] sm:$0xff]
  %v108 = vld [vmem:[%s1 + $0x2b8] sm:$0xff]
  %v109 = vld [vmem:[%s1 + $0x2c0] sm:$0xff]
  %v110 = vld [vmem:[%s1 + $0x2c8] sm:$0xff]
  %v111 = vld [vmem:[%s1 + $0x2d0] sm:$0xff]
  %v112 = vld [vmem:[%s1 + $0x2d8] sm:$0xff]
  %v113 = vld [vmem:[%s1 + $0x2e0] sm:$0xff]
  %v114 = vld [vmem:[%s1 + $0x2e8] sm:$0xff]
  %v115 = vld [vmem:[%s1 + $0x2f0] sm:$0xff]
  %v116 = vld [vmem:[%s1 + $0x2f8] sm:$0xff]
  %v117 = vld [vmem:[%s1 + $0x300] sm:$0xff]
  %v118 = vld [vmem:[%s1 + $0x308] sm:$0xff]
  %v119 = vld [vmem:[%s2] sm:$0x1]
  %v121 = vlaneseq
  %v122 = vshrl.u32 %v121, 7
  %v123 = vsub.s32 0, %v122
  %v124 = vrot.slane %v119, %v123
  %vm126 = vcmask 130048
  %v128 = vsel %vm126, %v20, 0
  %130 = vmatprep.subr.mxu0 0.0
  %131 = vmatpush1.msra.mxu0 %v21
  %132 = vmatprep.subr.mxu0 0.0
  %133 = vmatpush1.msra.mxu0 %v22
  %134 = vmatprep.subr.mxu0 0.0
  %135 = vmatpush1.msra.mxu0 %v23
  %136 = vmatprep.subr.mxu0 0.0
  %137 = vmatpush1.msra.mxu0 %v24
  %138 = vmatprep.subr.mxu0 0.0
  %139 = vmatpush1.msra.mxu0 %v25
  %140 = vmatprep.subr.mxu0 0.0
  %141 = vmatpush1.msra.mxu0 %v26
  %142 = vmatprep.subr.mxu0 0.0
  %143 = vmatpush1.msra.mxu0 %v27
  %144 = vmatprep.subr.mxu0 0.0
  %145 = vmatpush1.msra.mxu0 %v28
  %146 = vmatprep.subr.mxu0 0.0
  %147 = vmatpush1.msra.mxu0 %v29
  %148 = vmatprep.subr.mxu0 0.0
  %149 = vmatpush1.msra.mxu0 %v30
  %150 = vmatprep.subr.mxu0 0.0
  %151 = vmatpush1.msra.mxu0 %v31
  %152 = vmatprep.subr.mxu0 0.0
  %153 = vmatpush1.msra.mxu0 %v32
  %154 = vmatprep.subr.mxu0 0.0
  %155 = vmatpush1.msra.mxu0 %v33
  %156 = vmatprep.subr.mxu0 0.0
  %157 = vmatpush1.msra.mxu0 %v34
  %158 = vmatprep.subr.mxu0 0.0
  %159 = vmatpush1.msra.mxu0 %v35
  %160 = vmatprep.subr.mxu0 0.0
  %161 = vmatpush1.msra.mxu0 %v36
  %162 = vmatprep.subr.mxu0 0.0
  %163 = vmatpush1.msra.mxu0 %v37
  %164 = vmatprep.subr.mxu0 0.0
  %165 = vmatpush1.msra.mxu0 %v38
  %166 = vmatprep.subr.mxu0 0.0
  %167 = vmatpush1.msra.mxu0 %v39
  %168 = vmatprep.subr.mxu0 0.0
  %169 = vmatpush1.msra.mxu0 %v40
  %170 = vmatprep.subr.mxu0 0.0
  %171 = vmatpush1.msra.mxu0 %v41
  %172 = vmatprep.subr.mxu0 0.0
  %173 = vmatpush1.msra.mxu0 %v42
  %174 = vmatprep.subr.mxu0 0.0
  %175 = vmatpush1.msra.mxu0 %v43
  %176 = vmatprep.subr.mxu0 0.0
  %177 = vmatpush1.msra.mxu0 %v44
  %178 = vmatprep.subr.mxu0 0.0
  %179 = vmatpush1.msra.mxu0 %v45
  %180 = vmatprep.subr.mxu0 0.0
  %181 = vmatpush1.msra.mxu0 %v46
  %182 = vmatprep.subr.mxu0 0.0
  %183 = vmatpush1.msra.mxu0 %v47
  %184 = vmatprep.subr.mxu0 0.0
  %185 = vmatpush1.msra.mxu0 %v48
  %186 = vmatprep.subr.mxu0 0.0
  %187 = vmatpush1.msra.mxu0 %v49
  %188 = vmatprep.subr.mxu0 0.0
  %189 = vmatpush1.msra.mxu0 %v50
  %190 = vmatprep.subr.mxu0 0.0
  %191 = vmatpush1.msra.mxu0 %v51
  %192 = vmatprep.subr.mxu0 0.0
  %193 = vmatpush1.msra.mxu0 %v52
  %194 = vmatprep.mubr.f32.mxu0 %v15
  %195 = vmatmul.mubr.f32.gmra.mrb[0].mxu0 %v14
  %v196 = vpop.f32.mrb[0].mxu0
  %v197 = vadd.f32 %v124, %v196
  %v198 = vpop.f32.mrb[0].mxu0
  %199 = vdwg.mxu0
  %200 = vmatprep.subr.mxu0 0.0
  %201 = vmatpush1.msra.mxu0 %v53
  %202 = vmatprep.subr.mxu0 0.0
  %203 = vmatpush1.msra.mxu0 %v54
  %204 = vmatprep.subr.mxu0 0.0
  %205 = vmatpush1.msra.mxu0 %v55
  %206 = vmatprep.subr.mxu0 0.0
  %207 = vmatpush1.msra.mxu0 %v56
  %208 = vmatprep.subr.mxu0 0.0
  %209 = vmatpush1.msra.mxu0 %v57
  %210 = vmatprep.subr.mxu0 0.0
  %211 = vmatpush1.msra.mxu0 %v58
  %212 = vmatprep.subr.mxu0 0.0
  %213 = vmatpush1.msra.mxu0 %v59
  %214 = vmatprep.subr.mxu0 0.0
  %215 = vmatpush1.msra.mxu0 %v60
  %216 = vmatprep.subr.mxu0 0.0
  %217 = vmatpush1.msra.mxu0 %v61
  %218 = vmatprep.subr.mxu0 0.0
  %219 = vmatpush1.msra.mxu0 %v62
  %220 = vmatprep.subr.mxu0 0.0
  %221 = vmatpush1.msra.mxu0 %v63
  %222 = vmatprep.subr.mxu0 0.0
  %223 = vmatpush1.msra.mxu0 %v64
  %224 = vmatprep.subr.mxu0 0.0
  %225 = vmatpush1.msra.mxu0 %v65
  %226 = vmatprep.subr.mxu0 0.0
  %227 = vmatpush1.msra.mxu0 %v66
  %228 = vmatprep.subr.mxu0 0.0
  %229 = vmatpush1.msra.mxu0 %v67
  %230 = vmatprep.subr.mxu0 0.0
  %231 = vmatpush1.msra.mxu0 %v68
  %232 = vmatprep.subr.mxu0 0.0
  %233 = vmatpush1.msra.mxu0 %v69
  %234 = vmatprep.subr.mxu0 0.0
  %235 = vmatpush1.msra.mxu0 %v70
  %236 = vmatprep.subr.mxu0 0.0
  %237 = vmatpush1.msra.mxu0 %v71
  %238 = vmatprep.subr.mxu0 0.0
  %239 = vmatpush1.msra.mxu0 %v72
  %240 = vmatprep.subr.mxu0 0.0
  %241 = vmatpush1.msra.mxu0 %v73
  %242 = vmatprep.subr.mxu0 0.0
  %243 = vmatpush1.msra.mxu0 %v74
  %244 = vmatprep.subr.mxu0 0.0
  %245 = vmatpush1.msra.mxu0 %v75
  %246 = vmatprep.subr.mxu0 0.0
  %247 = vmatpush1.msra.mxu0 %v76
  %248 = vmatprep.subr.mxu0 0.0
  %249 = vmatpush1.msra.mxu0 %v77
  %250 = vmatprep.subr.mxu0 0.0
  %251 = vmatpush1.msra.mxu0 %v78
  %252 = vmatprep.subr.mxu0 0.0
  %253 = vmatpush1.msra.mxu0 %v79
  %254 = vmatprep.subr.mxu0 0.0
  %255 = vmatpush1.msra.mxu0 %v80
  %256 = vmatprep.subr.mxu0 0.0
  %257 = vmatpush1.msra.mxu0 %v81
  %258 = vmatprep.subr.mxu0 0.0
  %259 = vmatpush1.msra.mxu0 %v82
  %260 = vmatprep.subr.mxu0 0.0
  %261 = vmatpush1.msra.mxu0 %v83
  %262 = vmatprep.subr.mxu0 0.0
  %263 = vmatpush1.msra.mxu0 %v84
  %264 = vmatprep.mubr.f32.mxu0 %v17
  %265 = vmatmul.mubr.f32.gmra.mrb[0].mxu0 %v16
  %v266 = vpop.f32.mrb[0].mxu0
  %v267 = vadd.f32 %v197, %v266
  %v268 = vpop.f32.mrb[0].mxu0
  %269 = vdwg.mxu0
  %270 = vmatprep.subr.mxu0 0.0
  %271 = vmatpush1.msra.mxu0 %v85
  %272 = vmatprep.subr.mxu0 0.0
  %273 = vmatpush1.msra.mxu0 %v86
  %274 = vmatprep.subr.mxu0 0.0
  %275 = vmatpush1.msra.mxu0 %v87
  %276 = vmatprep.subr.mxu0 0.0
  %277 = vmatpush1.msra.mxu0 %v88
  %278 = vmatprep.subr.mxu0 0.0
  %279 = vmatpush1.msra.mxu0 %v89
  %280 = vmatprep.subr.mxu0 0.0
  %281 = vmatpush1.msra.mxu0 %v90
  %282 = vmatprep.subr.mxu0 0.0
  %283 = vmatpush1.msra.mxu0 %v91
  %284 = vmatprep.subr.mxu0 0.0
  %285 = vmatpush1.msra.mxu0 %v92
  %286 = vmatprep.subr.mxu0 0.0
  %287 = vmatpush1.msra.mxu0 %v93
  %288 = vmatprep.subr.mxu0 0.0
  %289 = vmatpush1.msra.mxu0 %v94
  %290 = vmatprep.subr.mxu0 0.0
  %291 = vmatpush1.msra.mxu0 %v95
  %292 = vmatprep.subr.mxu0 0.0
  %293 = vmatpush1.msra.mxu0 %v96
  %294 = vmatprep.subr.mxu0 0.0
  %295 = vmatpush1.msra.mxu0 %v97
  %296 = vmatprep.subr.mxu0 0.0
  %297 = vmatpush1.msra.mxu0 %v98
  %298 = vmatprep.subr.mxu0 0.0
  %299 = vmatpush1.msra.mxu0 %v99
  %300 = vmatprep.subr.mxu0 0.0
  %301 = vmatpush1.msra.mxu0 %v100
  %302 = vmatprep.subr.mxu0 0.0
  %303 = vmatpush1.msra.mxu0 %v101
  %304 = vmatprep.subr.mxu0 0.0
  %305 = vmatpush1.msra.mxu0 %v102
  %306 = vmatprep.subr.mxu0 0.0
  %307 = vmatpush1.msra.mxu0 %v103
  %308 = vmatprep.subr.mxu0 0.0
  %309 = vmatpush1.msra.mxu0 %v104
  %310 = vmatprep.subr.mxu0 0.0
  %311 = vmatpush1.msra.mxu0 %v105
  %312 = vmatprep.subr.mxu0 0.0
  %313 = vmatpush1.msra.mxu0 %v106
  %314 = vmatprep.subr.mxu0 0.0
  %315 = vmatpush1.msra.mxu0 %v107
  %316 = vmatprep.subr.mxu0 0.0
  %317 = vmatpush1.msra.mxu0 %v108
  %318 = vmatprep.subr.mxu0 0.0
  %319 = vmatpush1.msra.mxu0 %v109
  %320 = vmatprep.subr.mxu0 0.0
  %321 = vmatpush1.msra.mxu0 %v110
  %322 = vmatprep.subr.mxu0 0.0
  %323 = vmatpush1.msra.mxu0 %v111
  %324 = vmatprep.subr.mxu0 0.0
  %325 = vmatpush1.msra.mxu0 %v112
  %326 = vmatprep.subr.mxu0 0.0
  %327 = vmatpush1.msra.mxu0 %v113
  %328 = vmatprep.subr.mxu0 0.0
  %329 = vmatpush1.msra.mxu0 %v114
  %330 = vmatprep.subr.mxu0 0.0
  %331 = vmatpush1.msra.mxu0 %v115
  %332 = vmatprep.subr.mxu0 0.0
  %333 = vmatpush1.msra.mxu0 %v116
  %334 = vmatprep.mubr.f32.mxu0 %v19
  %335 = vmatmul.mubr.f32.gmra.mrb[0].mxu0 %v18
  %v336 = vpop.f32.mrb[0].mxu0
  %v337 = vadd.f32 %v267, %v336
  %v338 = vpop.f32.mrb[0].mxu0
  %339 = vdwg.mxu0
  %340 = vmatprep.subr.mxu0 0.0
  %341 = vmatpush1.msra.mxu0 %v117
  %342 = vmatprep.subr.mxu0 0.0
  %343 = vmatpush1.msra.mxu0 %v118
  %344 = vmatprep.subr.mxu0 0.0
  %345 = vmatpush1.msra.mxu0 0.0
  %346 = vmatprep.subr.mxu0 0.0
  %347 = vmatpush1.msra.mxu0 0.0
  %348 = vmatprep.subr.mxu0 0.0
  %349 = vmatpush1.msra.mxu0 0.0
  %350 = vmatprep.subr.mxu0 0.0
  %351 = vmatpush1.msra.mxu0 0.0
  %352 = vmatprep.subr.mxu0 0.0
  %353 = vmatpush1.msra.mxu0 0.0
  %354 = vmatprep.subr.mxu0 0.0
  %355 = vmatpush1.msra.mxu0 0.0
  %356 = vmatprep.subr.mxu0 0.0
  %357 = vmatpush1.msra.mxu0 0.0
  %358 = vmatprep.subr.mxu0 0.0
  %359 = vmatpush1.msra.mxu0 0.0
  %360 = vmatprep.subr.mxu0 0.0
  %361 = vmatpush1.msra.mxu0 0.0
  %362 = vmatprep.subr.mxu0 0.0
  %363 = vmatpush1.msra.mxu0 0.0
  %364 = vmatprep.subr.mxu0 0.0
  %365 = vmatpush1.msra.mxu0 0.0
  %366 = vmatprep.subr.mxu0 0.0
  %367 = vmatpush1.msra.mxu0 0.0
  %368 = vmatprep.subr.mxu0 0.0
  %369 = vmatpush1.msra.mxu0 0.0
  %370 = vmatprep.subr.mxu0 0.0
  %371 = vmatpush1.msra.mxu0 0.0
  %372 = vmatprep.subr.mxu0 0.0
  %373 = vmatpush1.msra.mxu0 0.0
  %374 = vmatprep.subr.mxu0 0.0
  %375 = vmatpush1.msra.mxu0 0.0
  %376 = vmatprep.subr.mxu0 0.0
  %377 = vmatpush1.msra.mxu0 0.0
  %378 = vmatprep.subr.mxu0 0.0
  %379 = vmatpush1.msra.mxu0 0.0
  %380 = vmatprep.subr.mxu0 0.0
  %381 = vmatpush1.msra.mxu0 0.0
  %382 = vmatprep.subr.mxu0 0.0
  %383 = vmatpush1.msra.mxu0 0.0
  %384 = vmatprep.subr.mxu0 0.0
  %385 = vmatpush1.msra.mxu0 0.0
  %386 = vmatprep.subr.mxu0 0.0
  %387 = vmatpush1.msra.mxu0 0.0
  %388 = vmatprep.subr.mxu0 0.0
  %389 = vmatpush1.msra.mxu0 0.0
  %390 = vmatprep.subr.mxu0 0.0
  %391 = vmatpush1.msra.mxu0 0.0
  %392 = vmatprep.subr.mxu0 0.0
  %393 = vmatpush1.msra.mxu0 0.0
  %394 = vmatprep.subr.mxu0 0.0
  %395 = vmatpush1.msra.mxu0 0.0
  %396 = vmatprep.subr.mxu0 0.0
  %397 = vmatpush1.msra.mxu0 0.0
  %398 = vmatprep.subr.mxu0 0.0
  %399 = vmatpush1.msra.mxu0 0.0
  %400 = vmatprep.subr.mxu0 0.0
  %401 = vmatpush1.msra.mxu0 0.0
  %402 = vmatprep.subr.mxu0 0.0
  %403 = vmatpush1.msra.mxu0 0.0
  %404 = vmatprep.mubr.f32.mxu0 0.0
  %405 = vmatmul.mubr.f32.gmra.mrb[0].mxu0 %v128
  %v406 = vpop.f32.mrb[0].mxu0
  %v407 = vadd.f32 %v337, %v406
  %v408 = vpop.f32.mrb[0].mxu0
  %409 = vdwg.mxu0
  %410 = vst [vmem:[%s3] sm:$0xff] %v407
  // Predicated region
  $region14: #{net_forward.1} parent=0 // pred_check
    _
  $region15: #{net_forward.1} parent=0 // pred_check_branch
    %412 = sbr.rel (0) target = $region17
  $region16: #{net_forward.1} parent=0 // pred_region
    _
  $region17: #{net_forward.1} parent=0 // pred_fallthru
    _
  // Predicated region
  $region18: #{net_forward.1} parent=0 // pred_check
    _
  $region19: #{net_forward.1} parent=0 // pred_check_branch
    %414 = sbr.rel (0) target = $region21
  $region20: #{net_forward.1} parent=0 // pred_region
    _
  $region21: #{net_forward.1} parent=0 // pred_fallthru
    _

</llo_original>
